<compile_context>
chip_gen: v5e
topology: v5e:2x2
jax: 0.10.0
libtpu: 0.0.40
codegen_flags: <defaults>
</compile_context>

<pallas_src>
import functools

import jax
import jax.numpy as jnp
from jax import lax
from jax.experimental import pallas as pl
from jax.experimental.pallas import tpu as pltpu


# ----------------------------------------------------------------------------
# helpers
# ----------------------------------------------------------------------------
def _pick_tile(dim, target, align):
    """Largest `align`-aligned divisor of `dim` that is <= target (else full dim)."""
    if dim <= target:
        return dim
    t = (target // align) * align
    while t >= align:
        if dim % t == 0:
            return t
        t -= align
    return dim


@functools.lru_cache(maxsize=1)
def _vmem_cap():
    """~75% of physical per-core VMEM (48 MiB on v7x, 96 MiB on v5e/v6e)."""
    try:
        cap = int(pltpu.get_tpu_info().vmem_capacity_bytes)
    except Exception:
        cap = 64 * 1024 * 1024  # conservative fallback (safe on every generation)
    return int(cap * 3 // 4)


def _clamp_vmem(nbytes):
    return int(min(max(int(nbytes), 32 * 1024 * 1024), _vmem_cap()))


# ----------------------------------------------------------------------------
# Kernel 1: tiled fused linear (matmul + bias) -- used for qkv and proj layers.
# ----------------------------------------------------------------------------
def _linear_bias_fullk_kernel(x_ref, w_ref, b_ref, o_ref):
    # Single K step: no accumulator scratch, no pl.when.
    acc = jnp.dot(
        x_ref[...].astype(jnp.bfloat16),
        w_ref[...].astype(jnp.bfloat16),
        preferred_element_type=jnp.float32,
    )
    o_ref[...] = (acc + b_ref[...].astype(jnp.float32)).astype(o_ref.dtype)


def _linear_bias_multik_kernel(x_ref, w_ref, b_ref, o_ref, acc_ref):
    k = pl.program_id(2)

    @pl.when(k == 0)
    def _():
        # Initialize the accumulator with the broadcast bias (saves one add later).
        acc_ref[...] = jnp.broadcast_to(
            b_ref[...].astype(jnp.float32), acc_ref.shape
        )

    acc_ref[...] += jnp.dot(
        x_ref[...].astype(jnp.bfloat16),
        w_ref[...].astype(jnp.bfloat16),
        preferred_element_type=jnp.float32,
    )

    @pl.when(k == pl.num_programs(2) - 1)
    def _():
        o_ref[...] = acc_ref[...].astype(o_ref.dtype)


def linear_bias(x2d, w, b, out_dtype=None):
    M, K = x2d.shape
    K2, N = w.shape
    assert K == K2
    if out_dtype is None:
        out_dtype = x2d.dtype
    b2 = b.reshape(1, N)

    x_is = jnp.dtype(x2d.dtype).itemsize
    w_is = jnp.dtype(w.dtype).itemsize
    o_is = jnp.dtype(out_dtype).itemsize

    # Big, 128-aligned tiles so per-step MXU work dwarfs the ~0.35us pipeline overhead.
    tm = _pick_tile(M, 512, 128)
    tn = _pick_tile(N, 512, 128)

    budget = min(40 * 1024 * 1024, _vmem_cap() - (8 << 20))

    def footprint(tk):
        return (
            2 * (tm * tk * x_is + tk * tn * w_is + tn * w_is)  # double-buffered inputs
            + 2 * tm * tn * o_is                               # double-buffered output
            + tm * tn * 4                                      # f32 accumulator
        )

    if footprint(K) <= budget:
        tk = K                                   # full-K: drops the K grid axis entirely
    else:
        tk = _pick_tile(K, 1024, 128)
        while footprint(tk) > budget and tk % 2 == 0 and tk > 128:
            tk //= 2

    vmem_bytes = footprint(tk) + (2 << 20)
    cost = pl.CostEstimate(
        flops=2 * M * N * K,
        transcendentals=0,
        # count tile re-reads: x re-read N/tn times, w re-read M/tm times.
        bytes_accessed=int(
            M * K * x_is * (N // tn) + K * N * w_is * (M // tm) + N * w_is + M * N * o_is
        ),
    )

    if tk == K:
        return pl.pallas_call(
            _linear_bias_fullk_kernel,
            out_shape=jax.ShapeDtypeStruct((M, N), out_dtype),
            grid=(M // tm, N // tn),
            in_specs=[
                pl.BlockSpec((tm, K), lambda i, j: (i, 0)),
                pl.BlockSpec((K, tn), lambda i, j: (0, j)),
                pl.BlockSpec((1, tn), lambda i, j: (0, j)),
            ],
            out_specs=pl.BlockSpec((tm, tn), lambda i, j: (i, j)),
            compiler_params=pltpu.CompilerParams(
                dimension_semantics=("parallel", "parallel"),
                vmem_limit_bytes=_clamp_vmem(vmem_bytes),
            ),
            cost_estimate=cost,
        )(x2d, w, b2)

    return pl.pallas_call(
        _linear_bias_multik_kernel,
        out_shape=jax.ShapeDtypeStruct((M, N), out_dtype),
        grid=(M // tm, N // tn, K // tk),
        in_specs=[
            pl.BlockSpec((tm, tk), lambda i, j, k: (i, k)),
            pl.BlockSpec((tk, tn), lambda i, j, k: (k, j)),
            pl.BlockSpec((1, tn), lambda i, j, k: (0, j)),
        ],
        out_specs=pl.BlockSpec((tm, tn), lambda i, j, k: (i, j)),
        scratch_shapes=[pltpu.VMEM((tm, tn), jnp.float32)],
        compiler_params=pltpu.CompilerParams(
            dimension_semantics=("parallel", "parallel", "arbitrary"),
            vmem_limit_bytes=_clamp_vmem(vmem_bytes),
        ),
        cost_estimate=cost,
    )(x2d, w, b2)


# ----------------------------------------------------------------------------
# Kernel 2: multi-head attention.  Grid (B, N // tq); the fused (N, 3*D) qkv slab
# stays resident across the query axis; per-head results are stored directly into
# the lane-dense (tq, D) output block (== transpose(1,2).flatten(2) layout).
# ----------------------------------------------------------------------------
def _attn_kernel(qkv_ref, o_ref, *, n_heads, scale, tq):
    d3 = qkv_ref.shape[-1]
    d = d3 // 3
    hd = d // n_heads

    qi = pl.program_id(1)
    row0 = pl.multiple_of(qi * tq, 8)

    q_blk = qkv_ref[0, pl.ds(row0, tq), :]   # (tq, 3*D) query rows of this tile
    kv_blk = qkv_ref[0]                      # (N,  3*D) full key/value rows (resident)

    for h in range(n_heads):
        c0 = h * hd
        # pre-scale q (tq*hd VPU work instead of tq*N on the score matrix)
        q = (q_blk[:, c0:c0 + hd] * scale).astype(jnp.bfloat16)          # (tq, hd)
        k = kv_blk[:, d + c0:d + c0 + hd].astype(jnp.bfloat16)           # (N, hd)
        v = kv_blk[:, 2 * d + c0:2 * d + c0 + hd].astype(jnp.bfloat16)   # (N, hd)

        # q . k^T via dimension numbers (contract last with last) -> no explicit k.T
        s = lax.dot_general(
            q, k,
            dimension_numbers=(((1,), (1,)), ((), ())),
            preferred_element_type=jnp.float32,
        )                                                                # (tq, N) f32

        m = jnp.max(s, axis=-1, keepdims=True)
        p = jnp.exp(s - m)                                               # f32 exp (EUP)
        denom = jnp.sum(p, axis=-1, keepdims=True)

        out_h = jnp.dot(p.astype(jnp.bfloat16), v,
                        preferred_element_type=jnp.float32)              # (tq, hd) f32
        # deferred normalization on the small (tq, hd) output, approx EUP reciprocal
        out_h = out_h * pl.reciprocal(denom, approx=True)

        # direct store into the lane-dense output slab (no concat / extra copy)
        o_ref[0, :, c0:c0 + hd] = out_h.astype(o_ref.dtype)


def mha(qkv, n_heads):
    """qkv: (B, N, 3*D) -> context (B, N, D) with heads concatenated along last dim."""
    B, N, D3 = qkv.shape
    D = D3 // 3
    hd = D // n_heads
    scale = hd ** (-0.5)

    tq = _pick_tile(N, 256, 8)               # query-row tile; bounds scores to (tq, N)
    out_dtype = qkv.dtype

    qkv_is = jnp.dtype(qkv.dtype).itemsize
    o_is = jnp.dtype(out_dtype).itemsize
    vmem_bytes = (
        2 * N * D3 * qkv_is          # double-buffered qkv slab (resident across q tiles)
        + 2 * tq * D * o_is          # double-buffered output block
        + (tq + N) * D3 * qkv_is     # q_blk / kv_blk materializations
        + 3 * tq * N * 4             # score / prob intermediates (f32)
        + tq * hd * 4
        + (2 << 20)
    )

    kern = functools.partial(_attn_kernel, n_heads=n_heads, scale=scale, tq=tq)

    return pl.pallas_call(
        kern,
        out_shape=jax.ShapeDtypeStruct((B, N, D), out_dtype),
        grid=(B, N // tq),
        in_specs=[pl.BlockSpec((1, N, D3), lambda b, qi: (b, 0, 0))],
        out_specs=pl.BlockSpec((1, tq, D), lambda b, qi: (b, qi, 0)),
        compiler_params=pltpu.CompilerParams(
            dimension_semantics=("parallel", "parallel"),
            vmem_limit_bytes=_clamp_vmem(vmem_bytes),
        ),
        cost_estimate=pl.CostEstimate(
            flops=4 * B * N * N * D,
            transcendentals=B * n_heads * N * N,
            bytes_accessed=int((B * N * D3 + B * N * D) * qkv_is),
        ),
    )(qkv)


# ----------------------------------------------------------------------------
# Full forward pass (no HBM-level transposes; reshapes are free axis splits).
# ----------------------------------------------------------------------------
def attention_forward(x, params, n_heads):
    B, N, D = x.shape

    # qkv projection: (B*N, D) @ (D, 3D) + b  ->  (B, N, 3D), bf16 intermediate
    qkv = linear_bias(x.reshape(B * N, D), params["w_qkv"], params["b_qkv"],
                      out_dtype=jnp.bfloat16)
    qkv = qkv.reshape(B, N, 3 * D)

    # attention; output already laid out as (B, N, D) with heads concatenated (bf16)
    ctx = mha(qkv, n_heads)

    # output projection back to the input dtype
    out = linear_bias(ctx.reshape(B * N, D), params["w_proj"], params["b_proj"],
                      out_dtype=x.dtype)
    return out.reshape(B, N, D)


# Pure-JAX f32 reference for correctness checking (same bf16-stored weights, upcast).
def attention_reference(x, params, n_heads):
    B, N, D = x.shape
    hd = D // n_heads
    scale = hd ** (-0.5)
    w_qkv = params["w_qkv"].astype(jnp.float32)
    b_qkv = params["b_qkv"].astype(jnp.float32)
    w_proj = params["w_proj"].astype(jnp.float32)
    b_proj = params["b_proj"].astype(jnp.float32)

    qkv = x @ w_qkv + b_qkv
    qkv = qkv.reshape(B, N, 3, n_heads, hd)
    qkv = jnp.transpose(qkv, (2, 0, 3, 1, 4))
    q, k, v = qkv[0], qkv[1], qkv[2]
    dp = jnp.einsum("bhqd,bhkd->bhqk", q, k) * scale
    attn = jax.nn.softmax(dp, axis=-1)
    wav = jnp.einsum("bhqk,bhkd->bhqd", attn, v)
    wav = jnp.transpose(wav, (0, 2, 1, 3)).reshape(B, N, D)
    return wav @ w_proj + b_proj


def init_params(key, dim):
    k1, k2, k3, k4 = jax.random.split(key, 4)
    # weights stored bf16 end-to-end (halves HBM traffic for the linears)
    return {
        "w_qkv": (jax.random.normal(k1, (dim, 3 * dim), jnp.float32) * 0.02
                  ).astype(jnp.bfloat16),
        "b_qkv": (jax.random.normal(k2, (3 * dim,), jnp.float32) * 0.02
                  ).astype(jnp.bfloat16),
        "w_proj": (jax.random.normal(k3, (dim, dim), jnp.float32) * 0.02
                   ).astype(jnp.bfloat16),
        "b_proj": (jax.random.normal(k4, (dim,), jnp.float32) * 0.02
                   ).astype(jnp.bfloat16),
    }


if __name__ == "__main__":
    B, N, DIM, HEADS = 2, 8, 32, 4   # n_samples, n_tokens (n_patches+1), dim, n_heads

    key = jax.random.PRNGKey(0)
    kx, kp = jax.random.split(key)
    x = jax.random.normal(kx, (B, N, DIM), jnp.float32)
    params = init_params(kp, DIM)

    fwd = jax.jit(functools.partial(attention_forward, n_heads=HEADS))
    out = fwd(x, params)
    out = jax.block_until_ready(out)

    ref = attention_reference(x, params, HEADS)
    assert out.shape == (B, N, DIM)
    # Tolerance loosened vs f32 reference: bf16 activations/intermediates with f32 MXU
    # accumulation and the approximate EUP reciprocal in the softmax denominator.
    assert jnp.allclose(out, ref, atol=5e-3, rtol=3e-2), "mismatch vs reference"

    print("KERNEL_OK")
</pallas_src>

<mosaic_0001>
module attributes {stable_mosaic.version = 11 : i64} {
  func.func @_linear_bias_fullk_kernel(%arg0: i32, %arg1: i32, %arg2: memref<16x32xbf16, #tpu.memory_space<vmem>>, %arg3: memref<32x32xbf16, #tpu.memory_space<vmem>>, %arg4: memref<1x32xbf16, #tpu.memory_space<vmem>>, %arg5: memref<16x32xf32, #tpu.memory_space<vmem>>) attributes {dimension_semantics = [#tpu.dimension_semantics<parallel>, #tpu.dimension_semantics<parallel>], iteration_bounds = array<i64: 1, 1>, scalar_prefetch = 0 : i64, scratch_operands = 0 : i64, tpu.core_type = #tpu.core_type<tc>, window_params = [{transform_indices = @transform_0, window_bounds = array<i64: 16, 32>}, {transform_indices = @transform_1, window_bounds = array<i64: 32, 32>}, {transform_indices = @transform_2, window_bounds = array<i64: 1, 32>}, {transform_indices = @transform_3, window_bounds = array<i64: 16, 32>}]} {
    %c0 = arith.constant 0 : index
    %c0_0 = arith.constant 0 : index
    %0 = vector.load %arg2[%c0, %c0_0] : memref<16x32xbf16, #tpu.memory_space<vmem>>, vector<16x32xbf16>
    %c0_1 = arith.constant 0 : index
    %c0_2 = arith.constant 0 : index
    %1 = vector.load %arg3[%c0_1, %c0_2] : memref<32x32xbf16, #tpu.memory_space<vmem>>, vector<32x32xbf16>
    %cst = arith.constant dense<0.000000e+00> : vector<16x32xf32>
    %2 = tpu.matmul %0, %1, %cst {dimension_numbers = #tpu.dot_dimension_numbers<[1], [0], [0], [1], [0, 0, 1, 1], [], []>} : vector<16x32xbf16>, vector<32x32xbf16>, vector<16x32xf32> -> vector<16x32xf32>
    %c0_3 = arith.constant 0 : index
    %c0_4 = arith.constant 0 : index
    %3 = vector.load %arg4[%c0_3, %c0_4] : memref<1x32xbf16, #tpu.memory_space<vmem>>, vector<1x32xbf16>
    %4 = arith.extf %3 : vector<1x32xbf16> to vector<1x32xf32>
    %5 = vector.broadcast %4 : vector<1x32xf32> to vector<16x32xf32>
    %6 = arith.addf %2, %5 : vector<16x32xf32>
    %c0_5 = arith.constant 0 : index
    %c0_6 = arith.constant 0 : index
    %7 = vector.load %arg5[%c0_5, %c0_6] : memref<16x32xf32, #tpu.memory_space<vmem>>, vector<16x32xf32>
    tpu.vector_store %arg5[%c0_5, %c0_6], %6 {strides = array<i32>} : memref<16x32xf32, #tpu.memory_space<vmem>>, vector<16x32xf32>,
    return
  }
  func.func @transform_0(%arg0: i32, %arg1: i32) -> (i32, i32) {
    %c0_i32 = arith.constant 0 : i32
    %c0_i32_0 = arith.constant 0 : i32
    return %arg0, %c0_i32 : i32, i32
  }
  func.func @transform_1(%arg0: i32, %arg1: i32) -> (i32, i32) {
    %c0_i32 = arith.constant 0 : i32
    %c0_i32_0 = arith.constant 0 : i32
    return %c0_i32, %arg1 : i32, i32
  }
  func.func @transform_2(%arg0: i32, %arg1: i32) -> (i32, i32) {
    %c0_i32 = arith.constant 0 : i32
    %c0_i32_0 = arith.constant 0 : i32
    return %c0_i32, %arg1 : i32, i32
  }
  func.func @transform_3(%arg0: i32, %arg1: i32) -> (i32, i32) {
    %c0_i32 = arith.constant 0 : i32
    return %arg0, %arg1 : i32, i32
  }
}

module attributes {stable_mosaic.version = 11 : i64} {
  func.func @_linear_bias_fullk_kernel(%arg0: i32, %arg1: i32, %arg2: memref<16x32xf32, #tpu.memory_space<vmem>>, %arg3: memref<32x96xbf16, #tpu.memory_space<vmem>>, %arg4: memref<1x96xbf16, #tpu.memory_space<vmem>>, %arg5: memref<16x96xbf16, #tpu.memory_space<vmem>>) attributes {dimension_semantics = [#tpu.dimension_semantics<parallel>, #tpu.dimension_semantics<parallel>], iteration_bounds = array<i64: 1, 1>, scalar_prefetch = 0 : i64, scratch_operands = 0 : i64, tpu.core_type = #tpu.core_type<tc>, window_params = [{transform_indices = @transform_0, window_bounds = array<i64: 16, 32>}, {transform_indices = @transform_1, window_bounds = array<i64: 32, 96>}, {transform_indices = @transform_2, window_bounds = array<i64: 1, 96>}, {transform_indices = @transform_3, window_bounds = array<i64: 16, 96>}]} {
    %c0 = arith.constant 0 : index
    %c0_0 = arith.constant 0 : index
    %0 = vector.load %arg2[%c0, %c0_0] : memref<16x32xf32, #tpu.memory_space<vmem>>, vector<16x32xf32>
    %1 = arith.truncf %0 : vector<16x32xf32> to vector<16x32xbf16>
    %c0_1 = arith.constant 0 : index
    %c0_2 = arith.constant 0 : index
    %2 = vector.load %arg3[%c0_1, %c0_2] : memref<32x96xbf16, #tpu.memory_space<vmem>>, vector<32x96xbf16>
    %cst = arith.constant dense<0.000000e+00> : vector<16x96xf32>
    %3 = tpu.matmul %1, %2, %cst {dimension_numbers = #tpu.dot_dimension_numbers<[1], [0], [0], [1], [0, 0, 1, 1], [], []>} : vector<16x32xbf16>, vector<32x96xbf16>, vector<16x96xf32> -> vector<16x96xf32>
    %c0_3 = arith.constant 0 : index
    %c0_4 = arith.constant 0 : index
    %4 = vector.load %arg4[%c0_3, %c0_4] : memref<1x96xbf16, #tpu.memory_space<vmem>>, vector<1x96xbf16>
    %5 = arith.extf %4 : vector<1x96xbf16> to vector<1x96xf32>
    %6 = vector.broadcast %5 : vector<1x96xf32> to vector<16x96xf32>
    %7 = arith.addf %3, %6 : vector<16x96xf32>
    %8 = arith.truncf %7 : vector<16x96xf32> to vector<16x96xbf16>
    %c0_5 = arith.constant 0 : index
    %c0_6 = arith.constant 0 : index
    %9 = vector.load %arg5[%c0_5, %c0_6] : memref<16x96xbf16, #tpu.memory_space<vmem>>, vector<16x96xbf16>
    tpu.vector_store %arg5[%c0_5, %c0_6], %8 {strides = array<i32>} : memref<16x96xbf16, #tpu.memory_space<vmem>>, vector<16x96xbf16>,
    return
  }
  func.func @transform_0(%arg0: i32, %arg1: i32) -> (i32, i32) {
    %c0_i32 = arith.constant 0 : i32
    %c0_i32_0 = arith.constant 0 : i32
    return %arg0, %c0_i32 : i32, i32
  }
  func.func @transform_1(%arg0: i32, %arg1: i32) -> (i32, i32) {
    %c0_i32 = arith.constant 0 : i32
    %c0_i32_0 = arith.constant 0 : i32
    return %c0_i32, %arg1 : i32, i32
  }
  func.func @transform_2(%arg0: i32, %arg1: i32) -> (i32, i32) {
    %c0_i32 = arith.constant 0 : i32
    %c0_i32_0 = arith.constant 0 : i32
    return %c0_i32, %arg1 : i32, i32
  }
  func.func @transform_3(%arg0: i32, %arg1: i32) -> (i32, i32) {
    %c0_i32 = arith.constant 0 : i32
    return %arg0, %arg1 : i32, i32
  }
}

module attributes {stable_mosaic.version = 11 : i64} {
  func.func @_attn_kernel(%arg0: i32, %arg1: i32, %arg2: memref<1x8x96xbf16, #tpu.memory_space<vmem>>, %arg3: memref<1x8x32xbf16, #tpu.memory_space<vmem>>) attributes {dimension_semantics = [#tpu.dimension_semantics<parallel>, #tpu.dimension_semantics<parallel>], iteration_bounds = array<i64: 2, 1>, scalar_prefetch = 0 : i64, scratch_operands = 0 : i64, tpu.core_type = #tpu.core_type<tc>, window_params = [{transform_indices = @transform_0, window_bounds = array<i64: 1, 8, 96>}, {transform_indices = @transform_1, window_bounds = array<i64: 1, 8, 32>}]} {
    %c8_i32 = arith.constant 8 : i32
    %0 = arith.muli %arg1, %c8_i32 : i32
    %1 = tpu.assume_multiple %0, 8 : i32
    %c0 = arith.constant 0 : index
    %2 = arith.index_cast %1 : i32 to index
    %c0_0 = arith.constant 0 : index
    %3 = vector.load %arg2[%c0, %2, %c0_0] : memref<1x8x96xbf16, #tpu.memory_space<vmem>>, vector<1x8x96xbf16>
    %4 = vector.shape_cast %3 : vector<1x8x96xbf16> to vector<8x96xbf16>
    %c0_1 = arith.constant 0 : index
    %c0_2 = arith.constant 0 : index
    %c0_3 = arith.constant 0 : index
    %5 = vector.load %arg2[%c0_1, %c0_2, %c0_3] : memref<1x8x96xbf16, #tpu.memory_space<vmem>>, vector<1x8x96xbf16>
    %6 = vector.shape_cast %5 : vector<1x8x96xbf16> to vector<8x96xbf16>
    %7 = vector.extract_strided_slice %4 {offsets = [0, 0], sizes = [8, 8], strides = [1, 1]} : vector<8x96xbf16> to vector<8x8xbf16>
    %cst = arith.constant 3.535160e-01 : bf16
    %8 = vector.broadcast %cst : bf16 to vector<8x8xbf16>
    %9 = arith.mulf %7, %8 : vector<8x8xbf16>
    %10 = vector.extract_strided_slice %6 {offsets = [0, 32], sizes = [8, 8], strides = [1, 1]} : vector<8x96xbf16> to vector<8x8xbf16>
    %11 = vector.extract_strided_slice %6 {offsets = [0, 64], sizes = [8, 8], strides = [1, 1]} : vector<8x96xbf16> to vector<8x8xbf16>
    %cst_4 = arith.constant dense<0.000000e+00> : vector<8x8xf32>
    %12 = tpu.matmul %9, %10, %cst_4 {dimension_numbers = #tpu.dot_dimension_numbers<[1], [1], [0], [0], [0, 0, 1, 0], [], []>} : vector<8x8xbf16>, vector<8x8xbf16>, vector<8x8xf32> -> vector<8x8xf32>
    %cst_5 = arith.constant dense<0xFF800000> : vector<8xf32>
    %13 = vector.multi_reduction <maximumf>, %12, %cst_5 [1] : vector<8x8xf32> to vector<8xf32>
    %14 = vector.shape_cast %13 : vector<8xf32> to vector<8x1xf32>
    %15 = vector.broadcast %14 : vector<8x1xf32> to vector<8x8xf32>
    %16 = arith.subf %12, %15 : vector<8x8xf32>
    %17 = math.exp %16 : vector<8x8xf32>
    %cst_6 = arith.constant dense<0.000000e+00> : vector<8xf32>
    %18 = vector.multi_reduction <add>, %17, %cst_6 [1] : vector<8x8xf32> to vector<8xf32>
    %19 = vector.shape_cast %18 : vector<8xf32> to vector<8x1xf32>
    %20 = arith.truncf %17 : vector<8x8xf32> to vector<8x8xbf16>
    %cst_7 = arith.constant dense<0.000000e+00> : vector<8x8xf32>
    %21 = tpu.matmul %20, %11, %cst_7 {dimension_numbers = #tpu.dot_dimension_numbers<[1], [0], [0], [1], [0, 0, 1, 1], [], []>} : vector<8x8xbf16>, vector<8x8xbf16>, vector<8x8xf32> -> vector<8x8xf32>
    %22 = tpu.reciprocal %19 {approx = true} : vector<8x1xf32> -> vector<8x1xf32>
    %23 = vector.broadcast %22 : vector<8x1xf32> to vector<8x8xf32>
    %24 = arith.mulf %21, %23 : vector<8x8xf32>
    %25 = arith.truncf %24 : vector<8x8xf32> to vector<8x8xbf16>
    %c0_8 = arith.constant 0 : index
    %c0_9 = arith.constant 0 : index
    %c0_10 = arith.constant 0 : index
    %26 = vector.load %arg3[%c0_8, %c0_9, %c0_10] : memref<1x8x32xbf16, #tpu.memory_space<vmem>>, vector<1x8x8xbf16>
    %27 = vector.shape_cast %26 : vector<1x8x8xbf16> to vector<8x8xbf16>
    %28 = vector.shape_cast %25 : vector<8x8xbf16> to vector<1x8x8xbf16>
    tpu.vector_store %arg3[%c0_8, %c0_9, %c0_10], %28 {strides = array<i32>} : memref<1x8x32xbf16, #tpu.memory_space<vmem>>, vector<1x8x8xbf16>,
    %29 = vector.extract_strided_slice %4 {offsets = [0, 8], sizes = [8, 8], strides = [1, 1]} : vector<8x96xbf16> to vector<8x8xbf16>
    %cst_11 = arith.constant 3.535160e-01 : bf16
    %30 = vector.broadcast %cst_11 : bf16 to vector<8x8xbf16>
    %31 = arith.mulf %29, %30 : vector<8x8xbf16>
    %32 = vector.extract_strided_slice %6 {offsets = [0, 40], sizes = [8, 8], strides = [1, 1]} : vector<8x96xbf16> to vector<8x8xbf16>
    %33 = vector.extract_strided_slice %6 {offsets = [0, 72], sizes = [8, 8], strides = [1, 1]} : vector<8x96xbf16> to vector<8x8xbf16>
    %cst_12 = arith.constant dense<0.000000e+00> : vector<8x8xf32>
    %34 = tpu.matmul %31, %32, %cst_12 {dimension_numbers = #tpu.dot_dimension_numbers<[1], [1], [0], [0], [0, 0, 1, 0], [], []>} : vector<8x8xbf16>, vector<8x8xbf16>, vector<8x8xf32> -> vector<8x8xf32>
    %cst_13 = arith.constant dense<0xFF800000> : vector<8xf32>
    %35 = vector.multi_reduction <maximumf>, %34, %cst_13 [1] : vector<8x8xf32> to vector<8xf32>
    %36 = vector.shape_cast %35 : vector<8xf32> to vector<8x1xf32>
    %37 = vector.broadcast %36 : vector<8x1xf32> to vector<8x8xf32>
    %38 = arith.subf %34, %37 : vector<8x8xf32>
    %39 = math.exp %38 : vector<8x8xf32>
    %cst_14 = arith.constant dense<0.000000e+00> : vector<8xf32>
    %40 = vector.multi_reduction <add>, %39, %cst_14 [1] : vector<8x8xf32> to vector<8xf32>
    %41 = vector.shape_cast %40 : vector<8xf32> to vector<8x1xf32>
    %42 = arith.truncf %39 : vector<8x8xf32> to vector<8x8xbf16>
    %cst_15 = arith.constant dense<0.000000e+00> : vector<8x8xf32>
    %43 = tpu.matmul %42, %33, %cst_15 {dimension_numbers = #tpu.dot_dimension_numbers<[1], [0], [0], [1], [0, 0, 1, 1], [], []>} : vector<8x8xbf16>, vector<8x8xbf16>, vector<8x8xf32> -> vector<8x8xf32>
    %44 = tpu.reciprocal %41 {approx = true} : vector<8x1xf32> -> vector<8x1xf32>
    %45 = vector.broadcast %44 : vector<8x1xf32> to vector<8x8xf32>
    %46 = arith.mulf %43, %45 : vector<8x8xf32>
    %47 = arith.truncf %46 : vector<8x8xf32> to vector<8x8xbf16>
    %c0_16 = arith.constant 0 : index
    %c0_17 = arith.constant 0 : index
    %c8 = arith.constant 8 : index
    %48 = vector.load %arg3[%c0_16, %c0_17, %c8] : memref<1x8x32xbf16, #tpu.memory_space<vmem>>, vector<1x8x8xbf16>
    %49 = vector.shape_cast %48 : vector<1x8x8xbf16> to vector<8x8xbf16>
    %50 = vector.shape_cast %47 : vector<8x8xbf16> to vector<1x8x8xbf16>
    tpu.vector_store %arg3[%c0_16, %c0_17, %c8], %50 {strides = array<i32>} : memref<1x8x32xbf16, #tpu.memory_space<vmem>>, vector<1x8x8xbf16>,
    %51 = vector.extract_strided_slice %4 {offsets = [0, 16], sizes = [8, 8], strides = [1, 1]} : vector<8x96xbf16> to vector<8x8xbf16>
    %cst_18 = arith.constant 3.535160e-01 : bf16
    %52 = vector.broadcast %cst_18 : bf16 to vector<8x8xbf16>
    %53 = arith.mulf %51, %52 : vector<8x8xbf16>
    %54 = vector.extract_strided_slice %6 {offsets = [0, 48], sizes = [8, 8], strides = [1, 1]} : vector<8x96xbf16> to vector<8x8xbf16>
    %55 = vector.extract_strided_slice %6 {offsets = [0, 80], sizes = [8, 8], strides = [1, 1]} : vector<8x96xbf16> to vector<8x8xbf16>
    %cst_19 = arith.constant dense<0.000000e+00> : vector<8x8xf32>
    %56 = tpu.matmul %53, %54, %cst_19 {dimension_numbers = #tpu.dot_dimension_numbers<[1], [1], [0], [0], [0, 0, 1, 0], [], []>} : vector<8x8xbf16>, vector<8x8xbf16>, vector<8x8xf32> -> vector<8x8xf32>
    %cst_20 = arith.constant dense<0xFF800000> : vector<8xf32>
    %57 = vector.multi_reduction <maximumf>, %56, %cst_20 [1] : vector<8x8xf32> to vector<8xf32>
    %58 = vector.shape_cast %57 : vector<8xf32> to vector<8x1xf32>
    %59 = vector.broadcast %58 : vector<8x1xf32> to vector<8x8xf32>
    %60 = arith.subf %56, %59 : vector<8x8xf32>
    %61 = math.exp %60 : vector<8x8xf32>
    %cst_21 = arith.constant dense<0.000000e+00> : vector<8xf32>
    %62 = vector.multi_reduction <add>, %61, %cst_21 [1] : vector<8x8xf32> to vector<8xf32>
    %63 = vector.shape_cast %62 : vector<8xf32> to vector<8x1xf32>
    %64 = arith.truncf %61 : vector<8x8xf32> to vector<8x8xbf16>
    %cst_22 = arith.constant dense<0.000000e+00> : vector<8x8xf32>
    %65 = tpu.matmul %64, %55, %cst_22 {dimension_numbers = #tpu.dot_dimension_numbers<[1], [0], [0], [1], [0, 0, 1, 1], [], []>} : vector<8x8xbf16>, vector<8x8xbf16>, vector<8x8xf32> -> vector<8x8xf32>
    %66 = tpu.reciprocal %63 {approx = true} : vector<8x1xf32> -> vector<8x1xf32>
    %67 = vector.broadcast %66 : vector<8x1xf32> to vector<8x8xf32>
    %68 = arith.mulf %65, %67 : vector<8x8xf32>
    %69 = arith.truncf %68 : vector<8x8xf32> to vector<8x8xbf16>
    %c0_23 = arith.constant 0 : index
    %c0_24 = arith.constant 0 : index
    %c16 = arith.constant 16 : index
    %70 = vector.load %arg3[%c0_23, %c0_24, %c16] : memref<1x8x32xbf16, #tpu.memory_space<vmem>>, vector<1x8x8xbf16>
    %71 = vector.shape_cast %70 : vector<1x8x8xbf16> to vector<8x8xbf16>
    %72 = vector.shape_cast %69 : vector<8x8xbf16> to vector<1x8x8xbf16>
    tpu.vector_store %arg3[%c0_23, %c0_24, %c16], %72 {strides = array<i32>} : memref<1x8x32xbf16, #tpu.memory_space<vmem>>, vector<1x8x8xbf16>,
    %73 = vector.extract_strided_slice %4 {offsets = [0, 24], sizes = [8, 8], strides = [1, 1]} : vector<8x96xbf16> to vector<8x8xbf16>
    %cst_25 = arith.constant 3.535160e-01 : bf16
    %74 = vector.broadcast %cst_25 : bf16 to vector<8x8xbf16>
    %75 = arith.mulf %73, %74 : vector<8x8xbf16>
    %76 = vector.extract_strided_slice %6 {offsets = [0, 56], sizes = [8, 8], strides = [1, 1]} : vector<8x96xbf16> to vector<8x8xbf16>
    %77 = vector.extract_strided_slice %6 {offsets = [0, 88], sizes = [8, 8], strides = [1, 1]} : vector<8x96xbf16> to vector<8x8xbf16>
    %cst_26 = arith.constant dense<0.000000e+00> : vector<8x8xf32>
    %78 = tpu.matmul %75, %76, %cst_26 {dimension_numbers = #tpu.dot_dimension_numbers<[1], [1], [0], [0], [0, 0, 1, 0], [], []>} : vector<8x8xbf16>, vector<8x8xbf16>, vector<8x8xf32> -> vector<8x8xf32>
    %cst_27 = arith.constant dense<0xFF800000> : vector<8xf32>
    %79 = vector.multi_reduction <maximumf>, %78, %cst_27 [1] : vector<8x8xf32> to vector<8xf32>
    %80 = vector.shape_cast %79 : vector<8xf32> to vector<8x1xf32>
    %81 = vector.broadcast %80 : vector<8x1xf32> to vector<8x8xf32>
    %82 = arith.subf %78, %81 : vector<8x8xf32>
    %83 = math.exp %82 : vector<8x8xf32>
    %cst_28 = arith.constant dense<0.000000e+00> : vector<8xf32>
    %84 = vector.multi_reduction <add>, %83, %cst_28 [1] : vector<8x8xf32> to vector<8xf32>
    %85 = vector.shape_cast %84 : vector<8xf32> to vector<8x1xf32>
    %86 = arith.truncf %83 : vector<8x8xf32> to vector<8x8xbf16>
    %cst_29 = arith.constant dense<0.000000e+00> : vector<8x8xf32>
    %87 = tpu.matmul %86, %77, %cst_29 {dimension_numbers = #tpu.dot_dimension_numbers<[1], [0], [0], [1], [0, 0, 1, 1], [], []>} : vector<8x8xbf16>, vector<8x8xbf16>, vector<8x8xf32> -> vector<8x8xf32>
    %88 = tpu.reciprocal %85 {approx = true} : vector<8x1xf32> -> vector<8x1xf32>
    %89 = vector.broadcast %88 : vector<8x1xf32> to vector<8x8xf32>
    %90 = arith.mulf %87, %89 : vector<8x8xf32>
    %91 = arith.truncf %90 : vector<8x8xf32> to vector<8x8xbf16>
    %c0_30 = arith.constant 0 : index
    %c0_31 = arith.constant 0 : index
    %c24 = arith.constant 24 : index
    %92 = vector.load %arg3[%c0_30, %c0_31, %c24] : memref<1x8x32xbf16, #tpu.memory_space<vmem>>, vector<1x8x8xbf16>
    %93 = vector.shape_cast %92 : vector<1x8x8xbf16> to vector<8x8xbf16>
    %94 = vector.shape_cast %91 : vector<8x8xbf16> to vector<1x8x8xbf16>
    tpu.vector_store %arg3[%c0_30, %c0_31, %c24], %94 {strides = array<i32>} : memref<1x8x32xbf16, #tpu.memory_space<vmem>>, vector<1x8x8xbf16>,
    return
  }
  func.func @transform_0(%arg0: i32, %arg1: i32) -> (i32, i32, i32) {
    %c0_i32 = arith.constant 0 : i32
    %c0_i32_0 = arith.constant 0 : i32
    %c0_i32_1 = arith.constant 0 : i32
    return %arg0, %c0_i32, %c0_i32_0 : i32, i32, i32
  }
  func.func @transform_1(%arg0: i32, %arg1: i32) -> (i32, i32, i32) {
    %c0_i32 = arith.constant 0 : i32
    %c0_i32_0 = arith.constant 0 : i32
    return %arg0, %arg1, %c0_i32 : i32, i32, i32
  }
}

</mosaic_0001>

<llo_original>
// kernel: attention_forward.5
$region0: #{attention_forward.5}
  #allocation0 [shape = 'u32[]', space=smem, size = 0x4, offset = 0x4, fixed_abs, tag = 'smem constant byte address 0x4 - core index']
  #allocation1 [shape = 'u32[72,128]{1,0:T(1,128)}', space=vmem, size = 0x9000, scoped, tag = 'internal scratch']
  %s0 = inlined_call_operand.vmem [shape: bf16[16,32], index: 0, kind: input, shape index: {}]
  %s1 = inlined_call_operand.vmem [shape: bf16[32,32], index: 1, kind: input, shape index: {}]
  %s2 = inlined_call_operand.vmem [shape: bf16[1,32], index: 2, kind: input, shape index: {}]
  %s3 = inlined_call_operand.hbm [shape: f32[16,32], index: 3, kind: output, shape index: {}]
  %s4 = sld [smem:[#allocation0]]
  $region22: #{attention_forward.5} parent=0
    _
  %s6 = ssub.s32 1, %s4
  %s7 = scalar_select 0, %s6, %s4
  $region1: #{attention_forward.5} parent=0
    #allocation2 [shape = 'u8[8192]{0}', space=vmem, size = 0x2000, scoped, tag = 'output window, operand 0, single buffered']
    #allocation3 [shape = 's32[1]{0}', space=sflag, size = 0x4, scoped, tag = 'scoped memory for attention_forward.5']
    %8 = vsyncpa [#allocation3], 0
    // Predicated region
    $region2: #{attention_forward.5} parent=1 // pred_check
      _
    $region3: #{attention_forward.5} parent=1 // pred_check_branch
      %10 = sbr.rel (0) target = $region5
    $region4: #{attention_forward.5} parent=1 // pred_region
      _
    $region5: #{attention_forward.5} parent=1 // pred_fallthru
      _
    // Predicated region
    $region6: #{attention_forward.5} parent=1 // pred_check
      _
    $region7: #{attention_forward.5} parent=1 // pred_check_branch
      %12 = sbr.rel (0) target = $region9
    $region8: #{attention_forward.5} parent=1 // pred_region
      _
    $region9: #{attention_forward.5} parent=1 // pred_fallthru
      _
    // Predicated region
    $region10: #{attention_forward.5} parent=1 // pred_check
      _
    $region11: #{attention_forward.5} parent=1 // pred_check_branch
      %14 = sbr.rel (0) target = $region13
    $region12: #{attention_forward.5} parent=1 // pred_region
      _
    $region13: #{attention_forward.5} parent=1 // pred_fallthru
      _
    %v16 = vld [vmem:[%s0] sm:$0xf]
    %v17 = vld [vmem:[%s0 + $0x4] sm:$0xf]
    %v18 = vld [vmem:[%s1] sm:$0xf]
    %v19 = vld [vmem:[%s1 + $0x4] sm:$0xf]
    %v20 = vld [vmem:[%s1 + $0x8] sm:$0xf]
    %v21 = vld [vmem:[%s1 + $0xc] sm:$0xf]
    %v22 = vld [vmem:[%s2] sm:$0x1]
    %v23 = vunpack.c.l.bf16 %v22
    %v24 = vperm.slane %v23, 0
    %v27 = vunpack.c.l.b16 %v16
    %v28 = vunpack.c.l.b16 %v17
    %v29 = vpack.c.b16 %v28, %v27
    %v34 = vunpack.c.l.b16 %v18
    %v35 = vunpack.c.l.b16 %v19
    %v36 = vunpack.c.l.b16 %v20
    %v37 = vunpack.c.l.b16 %v21
    %v38 = vpack.c.b16 %v35, %v34
    %v39 = vpack.c.b16 %v37, %v36
    %vm42 = vcmask 261120
    %v44 = vsel %vm42, %v29, 0
    %46 = vmatpush.bf16.msra.mxu0 0
    %47 = vmatpush.bf16.msra.mxu0 0
    %48 = vmatpush.bf16.msra.mxu0 0
    %49 = vmatpush.bf16.msra.mxu0 0
    %50 = vmatpush.bf16.msra.mxu0 0
    %51 = vmatpush.bf16.msra.mxu0 0
    %52 = vmatpush.bf16.msra.mxu0 %v39
    %53 = vmatpush.bf16.msra.mxu0 %v38
    %54 = vmatmul.bf16.gmra.mxu0 %v44
    %v55 = vpop.f32.mrf.mxu0
    %v56 = vadd.f32 %v24, %v55
    %v57 = vpop.f32.mrf.mxu0
    %v58 = vadd.f32 %v24, %v57
    %59 = vdwg.mxu0
    %60 = vst.msk [vmem:[#allocation2] sm:$0xff] %vm42, %v56
    %61 = vst.msk [vmem:[#allocation2 + $0x8] sm:$0xff] %vm42, %v58
    // Predicated region
    $region14: #{attention_forward.5} parent=1 // pred_check
      _
    $region15: #{attention_forward.5} parent=1 // pred_check_branch
      %63 = sbr.rel (0) target = $region17
    $region16: #{attention_forward.5} parent=1 // pred_region
      %65 = vsyncadd [#allocation3], 0
      %s66 = sshll.u32 [#allocation2], 4
      %s67 = int_to_ptr.vmem [resolvable:$true] %s66
      %s68 = sshll.u32 %s3, 4
      %s69 = int_to_ptr.hbm [resolvable:$true] %s68
      %74 = dma.vmem_to_hbm [thread:$0]  %s67, 256, %s69, [#allocation3], 128, 128, 8
    $region17: #{attention_forward.5} parent=1 // pred_fallthru
      _
    // Predicated region
    $region18: #{attention_forward.5} parent=1 // pred_check
      _
    $region19: #{attention_forward.5} parent=1 // pred_check_branch
      %76 = sbr.rel (0) target = $region21
    $region20: #{attention_forward.5} parent=1 // pred_region
      %78 = dma.done [#allocation3], 256
    $region21: #{attention_forward.5} parent=1 // pred_fallthru
      _
    %79 = vsyncpa [#allocation3], 1

// kernel: attention_forward.3
$region0: #{attention_forward.3}
  #allocation0 [shape = 'u32[]', space=smem, size = 0x4, offset = 0x4, fixed_abs, tag = 'smem constant byte address 0x4 - core index']
  #allocation1 [shape = 'u32[72,128]{1,0:T(1,128)}', space=vmem, size = 0x9000, scoped, tag = 'internal scratch']
  %s0 = inlined_call_operand.hbm [shape: f32[16,32], index: 0, kind: input, shape index: {}]
  %s1 = inlined_call_operand.hbm [shape: bf16[32,96], index: 1, kind: input, shape index: {}]
  %s2 = inlined_call_operand.vmem [shape: bf16[1,96], index: 2, kind: input, shape index: {}]
  %s3 = inlined_call_operand.vmem [shape: bf16[16,96], index: 3, kind: output, shape index: {}]
  %s4 = sld [smem:[#allocation0]]
  $region30: #{attention_forward.3} parent=0
    _
  %s6 = ssub.s32 1, %s4
  %s7 = scalar_select 0, %s6, %s4
  $region1: #{attention_forward.3} parent=0
    #allocation2 [shape = 'u8[8192]{0}', space=vmem, size = 0x2000, scoped, tag = 'input window, operand 0, single buffered']
    #allocation3 [shape = 's32[1]{0}', space=sflag, size = 0x4, scoped, tag = 'scoped memory for attention_forward.3']
    #allocation4 [shape = 'u8[8192]{0}', space=vmem, size = 0x2000, scoped, tag = 'input window, operand 1, single buffered']
    #allocation5 [shape = 's32[1]{0}', space=sflag, size = 0x4, scoped, tag = 'scoped memory for attention_forward.3']
    %8 = vsyncpa [#allocation3], 0
    %9 = vsyncpa [#allocation5], 0
    // Predicated region
    $region2: #{attention_forward.3} parent=1 // pred_check
      _
    $region3: #{attention_forward.3} parent=1 // pred_check_branch
      %11 = sbr.rel (0) target = $region5
    $region4: #{attention_forward.3} parent=1 // pred_region
      %13 = vsyncadd [#allocation3], 0
      %s14 = sshll.u32 %s0, 4
      %s15 = int_to_ptr.hbm [resolvable:$true] %s14
      %s16 = sshll.u32 [#allocation2], 4
      %s17 = int_to_ptr.vmem [resolvable:$true] %s16
      %22 = dma.hbm_to_vmem [thread:$0]  %s15, 256, %s17, [#allocation3], 128, 128, 8
    $region5: #{attention_forward.3} parent=1 // pred_fallthru
      _
    // Predicated region
    $region6: #{attention_forward.3} parent=1 // pred_check
      _
    $region7: #{attention_forward.3} parent=1 // pred_check_branch
      %24 = sbr.rel (0) target = $region9
    $region8: #{attention_forward.3} parent=1 // pred_region
      %26 = vsyncadd [#allocation5], 0
      %s27 = sshll.u32 %s1, 4
      %s28 = int_to_ptr.hbm [resolvable:$true] %s27
      %s29 = sshll.u32 [#allocation4], 4
      %s30 = int_to_ptr.vmem [resolvable:$true] %s29
      %35 = dma.hbm_to_vmem [thread:$0]  %s28, 256, %s30, [#allocation5], 64, 64, 4
    $region9: #{attention_forward.3} parent=1 // pred_fallthru
      _
    // Predicated region
    $region10: #{attention_forward.3} parent=1 // pred_check
      _
    $region11: #{attention_forward.3} parent=1 // pred_check_branch
      %37 = sbr.rel (0) target = $region13
    $region12: #{attention_forward.3} parent=1 // pred_region
      _
    $region13: #{attention_forward.3} parent=1 // pred_fallthru
      _
    // Predicated region
    $region14: #{attention_forward.3} parent=1 // pred_check
      _
    $region15: #{attention_forward.3} parent=1 // pred_check_branch
      %39 = sbr.rel (0) target = $region17
    $region16: #{attention_forward.3} parent=1 // pred_region
      %41 = dma.done [#allocation3], 256
    $region17: #{attention_forward.3} parent=1 // pred_fallthru
      _
    // Predicated region
    $region18: #{attention_forward.3} parent=1 // pred_check
      _
    $region19: #{attention_forward.3} parent=1 // pred_check_branch
      %43 = sbr.rel (0) target = $region21
    $region20: #{attention_forward.3} parent=1 // pred_region
      %45 = dma.done [#allocation5], 256
    $region21: #{attention_forward.3} parent=1 // pred_fallthru
      _
    %v47 = vld [vmem:[#allocation2] sm:$0xff]
    %v48 = vld [vmem:[#allocation2 + $0x8] sm:$0xff]
    %v49 = vpack.c.bf16 %v48, %v47
    %v50 = vld [vmem:[#allocation4] sm:$0xf]
    %v51 = vld [vmem:[#allocation4 + $0x4] sm:$0xf]
    %v52 = vld [vmem:[#allocation4 + $0x8] sm:$0xf]
    %v53 = vld [vmem:[#allocation4 + $0xc] sm:$0xf]
    %v54 = vld [vmem:[%s2] sm:$0x1]
    %v55 = vunpack.c.l.bf16 %v54
    %v56 = vperm.slane %v55, 0
    %v61 = vunpack.c.l.b16 %v50
    %v62 = vunpack.c.l.b16 %v51
    %v63 = vunpack.c.l.b16 %v52
    %v64 = vunpack.c.l.b16 %v53
    %v65 = vpack.c.b16 %v62, %v61
    %v66 = vpack.c.b16 %v64, %v63
    %vm69 = vcmask 261120
    %v71 = vsel %vm69, %v49, 0
    %73 = vmatpush.bf16.msra.mxu0 0
    %74 = vmatpush.bf16.msra.mxu0 0
    %75 = vmatpush.bf16.msra.mxu0 0
    %76 = vmatpush.bf16.msra.mxu0 0
    %77 = vmatpush.bf16.msra.mxu0 0
    %78 = vmatpush.bf16.msra.mxu0 0
    %79 = vmatpush.bf16.msra.mxu0 %v66
    %80 = vmatpush.bf16.msra.mxu0 %v65
    %81 = vmatmul.bf16.gmra.mxu0 %v71
    %v82 = vpop.f32.mrf.mxu0
    %v83 = vadd.f32 %v56, %v82
    %v84 = vpop.f32.mrf.mxu0
    %v85 = vadd.f32 %v56, %v84
    %86 = vdwg.mxu0
    %v87 = vpack.c.bf16 %v83, %v83
    %v88 = vpack.c.bf16 %v85, %v85
    %vm89 = vcmask 781312
    %90 = vst.msk [vmem:[%s3] sm:$0xf] %vm89, %v87
    %91 = vst.msk [vmem:[%s3 + $0x4] sm:$0xf] %vm89, %v88
    // Predicated region
    $region22: #{attention_forward.3} parent=1 // pred_check
      _
    $region23: #{attention_forward.3} parent=1 // pred_check_branch
      %93 = sbr.rel (0) target = $region25
    $region24: #{attention_forward.3} parent=1 // pred_region
      _
    $region25: #{attention_forward.3} parent=1 // pred_fallthru
      _
    // Predicated region
    $region26: #{attention_forward.3} parent=1 // pred_check
      _
    $region27: #{attention_forward.3} parent=1 // pred_check_branch
      %95 = sbr.rel (0) target = $region29
    $region28: #{attention_forward.3} parent=1 // pred_region
      _
    $region29: #{attention_forward.3} parent=1 // pred_fallthru
      _
    %96 = vsyncpa [#allocation3], 1
    %97 = vsyncpa [#allocation5], 1

// kernel: attention_forward.4
$region0: #{attention_forward.4}
  #allocation0 [shape = 'u32[]', space=smem, size = 0x4, offset = 0x4, fixed_abs, tag = 'smem constant byte address 0x4 - core index']
  #allocation1 [shape = 'u32[72,128]{1,0:T(1,128)}', space=vmem, size = 0x9000, scoped, tag = 'internal scratch']
  %s0 = inlined_call_operand.vmem [shape: bf16[2,8,96], index: 0, kind: input, shape index: {}]
  %s1 = inlined_call_operand.vmem [shape: bf16[2,8,32], index: 1, kind: output, shape index: {}]
  %s2 = sld [smem:[#allocation0]]
  $region37: #{attention_forward.4} parent=0
    _
  %s4 = ssub.s32 1, %s2
  %s5 = scalar_select 0, %s4, %s2
  loop: start=0, step=1, limit=4
  $region2: #{attention_forward.4} parent=0 // loop_pre_header
    _
  $region3: #{attention_forward.4} parent=0 // loop_header
    %s7 = sphi 0, %s11
    %p8 = scmp.ge.s32.totalorder %s7, 4
    %s14 = sphi 0, %s26
    %s15 = sphi 0, %s22
    %s16 = sphi 0, %s14
    %s17 = sphi 0, %s15
    %s18 = sphi 0, %s16
    %s19 = sphi 0, %s17
    %s29 = sphi 0, %s31
    %s32 = sphi 0, %s29
    %s33 = sphi 0, %s32
    %s49 = sphi 0, %s33
    %s57 = sphi 0, %s59
    %s60 = sphi 0, %s57
    %s61 = sphi 0, %s60
    %s77 = sphi 0, %s61
  $region4: #{attention_forward.4} parent=0 // loop_header_branch
    %10 = sbr.rel (%p8) target = $region8
  $region5: #{attention_forward.4} parent=0 // loop_body
    %s12 = ssub.s32 %s7, 1
    %s13 = ssub.s32 %s7, 2
    %s20 = sadd.s32 1, %s15
    %p21 = scmp.ge.s32.totalorder %s20, 1
    %s22 = scalar_select %p21, 0, %s20
    %s23 = sadd.s32 1, %s14
    %s24 = scalar_select %p21, %s23, %s14
    %p25 = scmp.ge.s32.totalorder %s24, 2
    %s26 = scalar_select %p25, 0, %s24
    %s27 = ssub.s32 %s14, %s26
    %p28 = scmp.eq.s32.totalorder %s27, 0
    %s30 = sadd.s32 %s29, 1
    %s31 = scalar_select %p28, %s29, %s30
    %p34 = pneg %p28
    %p35 = scmp.eq.s32.totalorder %s7, 1
    %p36 = por %p34, %p35
    %p37 = scmp.ne.s32.totalorder %s29, %s32
    %p38 = scmp.eq.s32.totalorder %s7, 0
    %p39 = por %p37, %p38
    %p40 = scmp.ne.s32.totalorder %s29, %s32
    %p41 = scmp.eq.s32.totalorder %s12, 1
    %p42 = por %p40, %p41
    %p43 = scmp.ne.s32.totalorder %s32, %s33
    %p44 = scmp.eq.s32.totalorder %s12, 0
    %p45 = por %p43, %p44
    %p46 = scmp.ne.s32.totalorder %s32, %s33
    %p47 = scmp.eq.s32.totalorder %s13, 1
    %p48 = por %p46, %p47
    %p50 = scmp.ne.s32.totalorder %s33, %s49
    %p51 = scmp.eq.s32.totalorder %s13, 0
    %p52 = por %p50, %p51
    %s53 = ssub.s32 %s14, %s26
    %s54 = ssub.s32 %s15, %s22
    %s55 = sor.u32 %s53, %s54
    %p56 = scmp.eq.s32.totalorder %s55, 0
    %s58 = sadd.s32 %s57, 1
    %s59 = scalar_select %p56, %s57, %s58
    %p62 = pneg %p56
    %p63 = scmp.eq.s32.totalorder %s7, 1
    %p64 = por %p62, %p63
    %p65 = scmp.ne.s32.totalorder %s57, %s60
    %p66 = scmp.eq.s32.totalorder %s7, 0
    %p67 = por %p65, %p66
    %p68 = scmp.ne.s32.totalorder %s57, %s60
    %p69 = scmp.eq.s32.totalorder %s12, 1
    %p70 = por %p68, %p69
    %p71 = scmp.ne.s32.totalorder %s60, %s61
    %p72 = scmp.eq.s32.totalorder %s12, 0
    %p73 = por %p71, %p72
    %p74 = scmp.ne.s32.totalorder %s60, %s61
    %p75 = scmp.eq.s32.totalorder %s13, 1
    %p76 = por %p74, %p75
    %p78 = scmp.ne.s32.totalorder %s61, %s77
    %p79 = scmp.eq.s32.totalorder %s13, 0
    %p80 = por %p78, %p79
    %p81 = scmp.le.s32.totalorder 1, %s7
    %p82 = scmp.lt.s32.totalorder %s7, 3
    %p83 = pnand %p81, %p82
    %p84 = pneg %p83
    // Predicated region
    $region9: #{attention_forward.4} parent=5 // pred_check
      _
    $region10: #{attention_forward.4} parent=5 // pred_check_branch
      %86 = sbr.rel (%p83) target = $region12
    $region11: #{attention_forward.4} parent=5 // pred_region
      %s87 = ssub.s32 %s7, 1
    $region12: #{attention_forward.4} parent=5 // pred_fallthru
      _
    %p88 = scmp.lt.s32.totalorder %s7, 2
    // Predicated region
    $region13: #{attention_forward.4} parent=5 // pred_check
      %p89 = pneg %p88
    $region14: #{attention_forward.4} parent=5 // pred_check_branch
      %91 = sbr.rel (%p89) target = $region16
    $region15: #{attention_forward.4} parent=5 // pred_region
      // Predicated region
      $region17: #{attention_forward.4} parent=15 // pred_check
        %p92 = pneg %p39
      $region18: #{attention_forward.4} parent=15 // pred_check_branch
        %94 = sbr.rel (%p92) target = $region20
      $region19: #{attention_forward.4} parent=15 // pred_region
        %p95 = scmp.lt.s32.totalorder %s14, 1
        %s96 = scalar_select %p95, %s14, 1
        %s97 = smul.addr %s96, 4
        %s98 = scalar_lea.vmem %s0, %s97
      $region20: #{attention_forward.4} parent=15 // pred_fallthru
        _
    $region16: #{attention_forward.4} parent=5 // pred_fallthru
      _
    %p99 = scmp.le.s32.totalorder 1, %s7
    %p100 = scmp.lt.s32.totalorder %s7, 3
    %p101 = pnand %p99, %p100
    %p102 = pneg %p101
    // Predicated region
    $region21: #{attention_forward.4} parent=5 // pred_check
      _
    $region22: #{attention_forward.4} parent=5 // pred_check_branch
      %104 = sbr.rel (%p101) target = $region24
    $region23: #{attention_forward.4} parent=5 // pred_region
      %s105 = ssub.s32 %s7, 1
      %p106 = scmp.lt.s32.totalorder %s16, 1
      %s107 = scalar_select %p106, %s16, 1
      %s108 = smul.addr %s107, 4
      %s109 = scalar_lea.vmem %s0, %s108
      %p110 = pneg %p45
      %p111 = pneg %p42
      %p112 = pneg %p73
      %p113 = pneg %p70
      %p114 = scmp.lt.s32.totalorder %s16, 1
      %s115 = scalar_select %p114, %s16, 1
      %p116 = scmp.lt.s32.totalorder %s17, 0
      %s117 = scalar_select %p116, %s17, 0
      %s118 = sadd.s32 %s117, %s115
      %s119 = smul.addr %s118, 4
      %s120 = scalar_lea.vmem %s1, %s119
      %p121 = scmp.lt.s32.totalorder %s16, 1
      %s122 = scalar_select %p121, %s16, 1
      %s123 = smul.addr %s122, 4
      %s124 = scalar_lea.vmem %s0, %s123
      %p125 = scmp.lt.s32.totalorder %s16, 1
      %s126 = scalar_select %p125, %s16, 1
      %p127 = scmp.lt.s32.totalorder %s17, 0
      %s128 = scalar_select %p127, %s17, 0
      %s129 = sadd.s32 %s128, %s126
      %s130 = smul.addr %s129, 4
      %s131 = scalar_lea.vmem %s1, %s130
      %s133 = smul.u32 %s17, 8
      %s134 = sshra.s32 %s133, 3
      %s135 = sand.u32 %s133, 7
      %s136 = smul.addr %s134, 4
      %s137 = scalar_lea.vmem %s124, %s136
      %v138 = vld [vmem:[%s137] sm:$0xf]
      %v139 = vld [vmem:[%s124] sm:$0xf]
      %v140 = vunpack.c.l.bf16 %v138
      %v141 = vmul.f32 %v140, 0.35351563
      %v142 = vpack.c.bf16 %v141, %v141
      %v144 = vunpack.c.l.b16 %v139
      %v145 = vpack.c.b16 %v144, %v144
      %146 = vrot.lane.b32.xlu0 %v145, 96
      %v147 = vpop.permute.xlu0 %146
      %vm148 = vcmask 64512
      %v150 = vsel %vm148, %v142, 0
      %v153 = vsel %vm148, %v147, 0
      %155 = vmatpush.bf16.xpose.msra.mxu0 0
      %156 = vmatpush.bf16.xpose.msra.mxu0 0
      %157 = vmatpush.bf16.xpose.msra.mxu0 0
      %158 = vmatpush.bf16.xpose.msra.mxu0 0
      %159 = vmatpush.bf16.xpose.msra.mxu0 0
      %160 = vmatpush.bf16.xpose.msra.mxu0 0
      %161 = vmatpush.bf16.xpose.msra.mxu0 0
      %162 = vmatpush.bf16.xpose.msra.mxu0 %v153
      %163 = vmatmul.bf16.gmra.mxu0 %v150
      %v164 = vpop.f32.mrf.mxu0
      %v165 = vadd.f32 0.0, %v164
      %v166 = vpop.f32.mrf.mxu0
      %167 = vdwg.mxu0
      %v168 = vsel %vm148, %v165, -inf
      %169 = vmax.xlane.f32.xlu0 %v168
      %v170 = vpop.xlane.xlu0 %169
      %v171 = vsub.f32 %v165, %v170
      %v172 = vmul.f32 %v171, 1.442695
      %v173 = vpow.pop %v172
      %v174 = vsel %vm148, %v173, 0.0
      %175 = vadd.xlane.f32.xlu0 %v174
      %v176 = vpop.xlane.xlu0 %175
      %v177 = vpack.c.bf16 %v173, %v173
      %178 = vrot.lane.b32.xlu0 %v145, 64
      %v179 = vpop.permute.xlu0 %178
      %v181 = vsel %vm148, %v177, 0
      %vm183 = vcmask 1043456
      %v185 = vsel %vm183, %v179, 0
      %187 = vmatpush.bf16.msra.mxu0 0
      %188 = vmatpush.bf16.msra.mxu0 0
      %189 = vmatpush.bf16.msra.mxu0 0
      %190 = vmatpush.bf16.msra.mxu0 0
      %191 = vmatpush.bf16.msra.mxu0 0
      %192 = vmatpush.bf16.msra.mxu0 0
      %193 = vmatpush.bf16.msra.mxu0 0
      %194 = vmatpush.bf16.msra.mxu0 %v185
      %195 = vmatmul.bf16.gmra.mxu0 %v181
      %v196 = vpop.f32.mrf.mxu0
      %v197 = vadd.f32 0.0, %v196
      %v198 = vpop.f32.mrf.mxu0
      %199 = vdwg.mxu0
      %v200 = vrcp.pop %v176
      %v201 = vmul.f32 %v197, %v200
      %v202 = vpack.c.bf16 %v201, %v201
      %vm203 = vcmask 60416
      %204 = vst.msk [vmem:[%s131] sm:$0xf] %vm203, %v202
      %206 = vrot.lane.b32.xlu0 %v142, 120
      %v207 = vpop.permute.xlu0 %206
      %208 = vrot.lane.b32.xlu0 %v145, 88
      %v209 = vpop.permute.xlu0 %208
      %v211 = vsel %vm148, %v207, 0
      %v214 = vsel %vm148, %v209, 0
      %216 = vmatpush.bf16.xpose.msra.mxu0 0
      %217 = vmatpush.bf16.xpose.msra.mxu0 0
      %218 = vmatpush.bf16.xpose.msra.mxu0 0
      %219 = vmatpush.bf16.xpose.msra.mxu0 0
      %220 = vmatpush.bf16.xpose.msra.mxu0 0
      %221 = vmatpush.bf16.xpose.msra.mxu0 0
      %222 = vmatpush.bf16.xpose.msra.mxu0 0
      %223 = vmatpush.bf16.xpose.msra.mxu0 %v214
      %224 = vmatmul.bf16.gmra.mxu0 %v211
      %v225 = vpop.f32.mrf.mxu0
      %v226 = vadd.f32 0.0, %v225
      %v227 = vpop.f32.mrf.mxu0
      %228 = vdwg.mxu0
      %v229 = vsel %vm148, %v226, -inf
      %230 = vmax.xlane.f32.xlu0 %v229
      %v231 = vpop.xlane.xlu0 %230
      %v232 = vsub.f32 %v226, %v231
      %v233 = vmul.f32 %v232, 1.442695
      %v234 = vpow.pop %v233
      %v235 = vsel %vm148, %v234, 0.0
      %236 = vadd.xlane.f32.xlu0 %v235
      %v237 = vpop.xlane.xlu0 %236
      %v238 = vpack.c.bf16 %v234, %v234
      %239 = vrot.lane.b32.xlu0 %v145, 56
      %v240 = vpop.permute.xlu0 %239
      %v242 = vsel %vm148, %v238, 0
      %v245 = vsel %vm183, %v240, 0
      %247 = vmatpush.bf16.msra.mxu0 0
      %248 = vmatpush.bf16.msra.mxu0 0
      %249 = vmatpush.bf16.msra.mxu0 0
      %250 = vmatpush.bf16.msra.mxu0 0
      %251 = vmatpush.bf16.msra.mxu0 0
      %252 = vmatpush.bf16.msra.mxu0 0
      %253 = vmatpush.bf16.msra.mxu0 0
      %254 = vmatpush.bf16.msra.mxu0 %v245
      %255 = vmatmul.bf16.gmra.mxu0 %v242
      %v256 = vpop.f32.mrf.mxu0
      %v257 = vadd.f32 0.0, %v256
      %v258 = vpop.f32.mrf.mxu0
      %259 = vdwg.mxu0
      %v260 = vrcp.pop %v237
      %v261 = vmul.f32 %v257, %v260
      %v262 = vpack.c.bf16 %v261, %v261
      %264 = vrot.lane.b32.xlu0 %v262, 8
      %v265 = vpop.permute.xlu0 %264
      %vm267 = vcmask 126016
      %268 = vst.msk [vmem:[%s131] sm:$0xf] %vm267, %v265
      %269 = vrot.lane.b32.xlu0 %v142, 112
      %v270 = vpop.permute.xlu0 %269
      %271 = vrot.lane.b32.xlu0 %v145, 80
      %v272 = vpop.permute.xlu0 %271
      %v274 = vsel %vm148, %v270, 0
      %v277 = vsel %vm148, %v272, 0
      %279 = vmatpush.bf16.xpose.msra.mxu0 0
      %280 = vmatpush.bf16.xpose.msra.mxu0 0
      %281 = vmatpush.bf16.xpose.msra.mxu0 0
      %282 = vmatpush.bf16.xpose.msra.mxu0 0
      %283 = vmatpush.bf16.xpose.msra.mxu0 0
      %284 = vmatpush.bf16.xpose.msra.mxu0 0
      %285 = vmatpush.bf16.xpose.msra.mxu0 0
      %286 = vmatpush.bf16.xpose.msra.mxu0 %v277
      %287 = vmatmul.bf16.gmra.mxu0 %v274
      %v288 = vpop.f32.mrf.mxu0
      %v289 = vadd.f32 0.0, %v288
      %v290 = vpop.f32.mrf.mxu0
      %291 = vdwg.mxu0
      %v292 = vsel %vm148, %v289, -inf
      %293 = vmax.xlane.f32.xlu0 %v292
      %v294 = vpop.xlane.xlu0 %293
      %v295 = vsub.f32 %v289, %v294
      %v296 = vmul.f32 %v295, 1.442695
      %v297 = vpow.pop %v296
      %v298 = vsel %vm148, %v297, 0.0
      %299 = vadd.xlane.f32.xlu0 %v298
      %v300 = vpop.xlane.xlu0 %299
      %v301 = vpack.c.bf16 %v297, %v297
      %302 = vrot.lane.b32.xlu0 %v145, 48
      %v303 = vpop.permute.xlu0 %302
      %v305 = vsel %vm148, %v301, 0
      %v308 = vsel %vm183, %v303, 0
      %310 = vmatpush.bf16.msra.mxu0 0
      %311 = vmatpush.bf16.msra.mxu0 0
      %312 = vmatpush.bf16.msra.mxu0 0
      %313 = vmatpush.bf16.msra.mxu0 0
      %314 = vmatpush.bf16.msra.mxu0 0
      %315 = vmatpush.bf16.msra.mxu0 0
      %316 = vmatpush.bf16.msra.mxu0 0
      %317 = vmatpush.bf16.msra.mxu0 %v308
      %318 = vmatmul.bf16.gmra.mxu0 %v305
      %v319 = vpop.f32.mrf.mxu0
      %v320 = vadd.f32 0.0, %v319
      %v321 = vpop.f32.mrf.mxu0
      %322 = vdwg.mxu0
      %v323 = vrcp.pop %v300
      %v324 = vmul.f32 %v320, %v323
      %v325 = vpack.c.bf16 %v324, %v324
      %327 = vrot.lane.b32.xlu0 %v325, 16
      %v328 = vpop.permute.xlu0 %327
      %vm330 = vcmask 191616
      %331 = vst.msk [vmem:[%s131] sm:$0xf] %vm330, %v328
      %332 = vrot.lane.b32.xlu0 %v142, 104
      %v333 = vpop.permute.xlu0 %332
      %334 = vrot.lane.b32.xlu0 %v145, 72
      %v335 = vpop.permute.xlu0 %334
      %v337 = vsel %vm148, %v333, 0
      %v340 = vsel %vm148, %v335, 0
      %342 = vmatpush.bf16.xpose.msra.mxu0 0
      %343 = vmatpush.bf16.xpose.msra.mxu0 0
      %344 = vmatpush.bf16.xpose.msra.mxu0 0
      %345 = vmatpush.bf16.xpose.msra.mxu0 0
      %346 = vmatpush.bf16.xpose.msra.mxu0 0
      %347 = vmatpush.bf16.xpose.msra.mxu0 0
      %348 = vmatpush.bf16.xpose.msra.mxu0 0
      %349 = vmatpush.bf16.xpose.msra.mxu0 %v340
      %350 = vmatmul.bf16.gmra.mxu0 %v337
      %v351 = vpop.f32.mrf.mxu0
      %v352 = vadd.f32 0.0, %v351
      %v353 = vpop.f32.mrf.mxu0
      %354 = vdwg.mxu0
      %v355 = vsel %vm148, %v352, -inf
      %356 = vmax.xlane.f32.xlu0 %v355
      %v357 = vpop.xlane.xlu0 %356
      %v358 = vsub.f32 %v352, %v357
      %v359 = vmul.f32 %v358, 1.442695
      %v360 = vpow.pop %v359
      %v361 = vsel %vm148, %v360, 0.0
      %362 = vadd.xlane.f32.xlu0 %v361
      %v363 = vpop.xlane.xlu0 %362
      %v364 = vpack.c.bf16 %v360, %v360
      %365 = vrot.lane.b32.xlu0 %v145, 40
      %v366 = vpop.permute.xlu0 %365
      %v368 = vsel %vm148, %v364, 0
      %v371 = vsel %vm183, %v366, 0
      %373 = vmatpush.bf16.msra.mxu0 0
      %374 = vmatpush.bf16.msra.mxu0 0
      %375 = vmatpush.bf16.msra.mxu0 0
      %376 = vmatpush.bf16.msra.mxu0 0
      %377 = vmatpush.bf16.msra.mxu0 0
      %378 = vmatpush.bf16.msra.mxu0 0
      %379 = vmatpush.bf16.msra.mxu0 0
      %380 = vmatpush.bf16.msra.mxu0 %v371
      %381 = vmatmul.bf16.gmra.mxu0 %v368
      %v382 = vpop.f32.mrf.mxu0
      %v383 = vadd.f32 0.0, %v382
      %v384 = vpop.f32.mrf.mxu0
      %385 = vdwg.mxu0
      %v386 = vrcp.pop %v363
      %v387 = vmul.f32 %v383, %v386
      %v388 = vpack.c.bf16 %v387, %v387
      %390 = vrot.lane.b32.xlu0 %v388, 24
      %v391 = vpop.permute.xlu0 %390
      %vm393 = vcmask 257216
      %394 = vst.msk [vmem:[%s131] sm:$0xf] %vm393, %v391
      %p395 = scmp.lt.s32.totalorder %s16, 1
      %s396 = scalar_select %p395, %s16, 1
      %p397 = scmp.lt.s32.totalorder %s17, 0
      %s398 = scalar_select %p397, %s17, 0
      %s399 = sadd.s32 %s398, %s396
      %s400 = smul.addr %s399, 4
      %s401 = scalar_lea.vmem %s1, %s400
      // Predicated region
      $region25: #{attention_forward.4} parent=23 // pred_check
        %p402 = pneg %p70
      $region26: #{attention_forward.4} parent=23 // pred_check_branch
        %404 = sbr.rel (%p402) target = $region28
      $region27: #{attention_forward.4} parent=23 // pred_region
        _
      $region28: #{attention_forward.4} parent=23 // pred_fallthru
        _
    $region24: #{attention_forward.4} parent=5 // pred_fallthru
      _
    %p405 = scmp.le.s32.totalorder 2, %s7
    // Predicated region
    $region29: #{attention_forward.4} parent=5 // pred_check
      %p406 = pneg %p405
    $region30: #{attention_forward.4} parent=5 // pred_check_branch
      %408 = sbr.rel (%p406) target = $region32
    $region31: #{attention_forward.4} parent=5 // pred_region
      %s409 = ssub.s32 %s7, 2
      // Predicated region
      $region33: #{attention_forward.4} parent=31 // pred_check
        %p410 = pneg %p76
      $region34: #{attention_forward.4} parent=31 // pred_check_branch
        %412 = sbr.rel (%p410) target = $region36
      $region35: #{attention_forward.4} parent=31 // pred_region
        %p413 = scmp.lt.s32.totalorder %s18, 1
        %s414 = scalar_select %p413, %s18, 1
        %p415 = scmp.lt.s32.totalorder %s19, 0
        %s416 = scalar_select %p415, %s19, 0
        %s417 = sadd.s32 %s416, %s414
        %s418 = smul.addr %s417, 4
        %s419 = scalar_lea.vmem %s1, %s418
      $region36: #{attention_forward.4} parent=31 // pred_fallthru
        _
    $region32: #{attention_forward.4} parent=5 // pred_fallthru
      _
  $region6: #{attention_forward.4} parent=0 // loop_footer
    %s11 = sadd.s32 1, %s7
  $region7: #{attention_forward.4} parent=0 // loop_footer_branch
    %6 = sbr.rel target = $region3
  $region8: #{attention_forward.4} parent=0 // loop_exit
    _

</llo_original>
